<compile_context>
chip_gen: v7x
topology: tpu7x:2x2x1
jax: 0.10.0
libtpu: 0.0.40
codegen_flags: <defaults>
</compile_context>

<pallas_src>
import functools

import jax
import jax.numpy as jnp
from jax.experimental import pallas as pl
from jax.experimental.pallas import tpu as pltpu


_VMEM_LIMIT = 32 * 1024 * 1024  # modest explicit budget; tiles below are small


# ----------------------------- kernels --------------------------------------

def _sigmoid_kernel(x_ref, o_ref):
    x = x_ref[...].astype(jnp.float32)
    o_ref[...] = jax.nn.sigmoid(x).astype(o_ref.dtype)


def _softmax3d_kernel(x_ref, o_ref, *, log):
    # block: (1, C, tl); reduce over axis=1 (the softmax/channel axis)
    x = x_ref[...].astype(jnp.float32)
    m = jnp.max(x, axis=1, keepdims=True)
    e = jnp.exp(x - m)
    s = jnp.sum(e, axis=1, keepdims=True)
    if log:
        out = (x - m) - jnp.log(s)
    else:
        out = e / s
    o_ref[...] = out.astype(o_ref.dtype)


def _softmax_lastaxis_kernel(x_ref, o_ref, *, log):
    # block: (tb, C); reduce over the last (lane) axis
    x = x_ref[...].astype(jnp.float32)
    m = jnp.max(x, axis=-1, keepdims=True)
    e = jnp.exp(x - m)
    s = jnp.sum(e, axis=-1, keepdims=True)
    if log:
        out = (x - m) - jnp.log(s)
    else:
        out = e / s
    o_ref[...] = out.astype(o_ref.dtype)


# ----------------------------- layout helpers --------------------------------

def _as_lane_dense_2d(x):
    """Flatten to (rows, cols) merging trailing dims until cols >= 128."""
    if x.ndim == 0:
        return x.reshape(1, 1)
    shape = x.shape
    cols = 1
    i = len(shape)
    while i > 0 and cols < 128:
        i -= 1
        cols *= shape[i]
    rows = 1
    for s in shape[:i]:
        rows *= s
    return x.reshape(rows, cols)


def _row_block(rows, cap=256):
    # block sublane dim: full extent if small, else a multiple of 8
    if rows <= 4 * cap:
        return rows
    return cap


def _col_block(cols, cap=2048):
    # block lane dim: full extent if small, else a multiple of 128
    if cols <= 2 * cap:
        return cols
    return cap


# ----------------------------- wrappers --------------------------------------

def identity(x):
    # nn.Identity forward is a no-op; do not burn HBM bandwidth on a copy.
    return x


def sigmoid(x):
    orig_shape = x.shape
    x2 = _as_lane_dense_2d(x)
    rows, cols = x2.shape
    br = _row_block(rows)
    bc = _col_block(cols)
    grid = (pl.cdiv(rows, br), pl.cdiv(cols, bc))
    out = pl.pallas_call(
        _sigmoid_kernel,
        out_shape=jax.ShapeDtypeStruct((rows, cols), x.dtype),
        grid=grid,
        in_specs=[pl.BlockSpec((br, bc), lambda i, j: (i, j))],
        out_specs=pl.BlockSpec((br, bc), lambda i, j: (i, j)),
        compiler_params=pltpu.CompilerParams(
            dimension_semantics=("parallel", "parallel"),
            vmem_limit_bytes=_VMEM_LIMIT),
    )(x2)
    return out.reshape(orig_shape)


def _choose_l_tile(c, l):
    """Tile size for the non-reduced L axis: multiple of 128, ~2 MiB budget."""
    budget_elems = (2 * 1024 * 1024) // (4 * max(c, 1))
    tl = max(128, (budget_elems // 128) * 128)
    tl = min(tl, 8192)
    if l <= tl:
        return l
    return tl


def _softmax_call(x, dim, log):
    ndim = x.ndim
    dim = dim % ndim
    shape = x.shape
    b = 1
    for s in shape[:dim]:
        b *= s
    c = shape[dim]
    l = 1
    for s in shape[dim + 1:]:
        l *= s

    if l == 1:
        # softmax over the last axis: reduce over lanes on a (B, C) view.
        x2 = x.reshape(b, c)
        tb = _row_block(b)
        kernel = functools.partial(_softmax_lastaxis_kernel, log=log)
        out = pl.pallas_call(
            kernel,
            out_shape=jax.ShapeDtypeStruct((b, c), x.dtype),
            grid=(pl.cdiv(b, tb),),
            in_specs=[pl.BlockSpec((tb, c), lambda i: (i, 0))],
            out_specs=pl.BlockSpec((tb, c), lambda i: (i, 0)),
            compiler_params=pltpu.CompilerParams(
                dimension_semantics=("parallel",),
                vmem_limit_bytes=_VMEM_LIMIT),
        )(x2)
        return out.reshape(shape)

    # Canonical (B, C, L) layout: axes before/after `dim` are contiguous,
    # so a reshape (no transpose) is enough.
    # TODO(synk): for 1 < L < 128 a transpose putting a larger dim on lanes
    # would be faster; the (1, C, L) block below is still correct.
    x3 = x.reshape(b, c, l)
    tl = _choose_l_tile(c, l)
    grid = (b, pl.cdiv(l, tl))
    kernel = functools.partial(_softmax3d_kernel, log=log)
    out = pl.pallas_call(
        kernel,
        out_shape=jax.ShapeDtypeStruct((b, c, l), x.dtype),
        grid=grid,
        in_specs=[pl.BlockSpec((1, c, tl), lambda i, j: (i, 0, j))],
        out_specs=pl.BlockSpec((1, c, tl), lambda i, j: (i, 0, j)),
        compiler_params=pltpu.CompilerParams(
            dimension_semantics=("parallel", "parallel"),
            vmem_limit_bytes=_VMEM_LIMIT),
    )(x3)
    return out.reshape(shape)


def softmax(x, dim=1):
    return _softmax_call(x, dim, log=False)


def log_softmax(x, dim=1):
    return _softmax_call(x, dim, log=True)


class Activation:
    """JAX/Pallas port of segmentation_models_pytorch.base.modules.Activation."""

    def __init__(self, name, **params):
        if name is None or name == "identity":
            self.activation = identity
        elif name == "sigmoid":
            self.activation = sigmoid
        elif name == "softmax2d":
            self.activation = functools.partial(softmax, dim=1, **params)
        elif name == "softmax":
            self.activation = functools.partial(softmax, dim=params.get("dim", 1))
        elif name == "logsoftmax":
            self.activation = functools.partial(log_softmax, dim=params.get("dim", 1))
        elif callable(name):
            # Matches PyTorch: the callable is a factory, e.g. nn.ReLU -> nn.ReLU()
            self.activation = name(**params)
        else:
            raise ValueError(
                "Activation should be callable/sigmoid/softmax/logsoftmax/None; "
                "got {}".format(name)
            )

    def __call__(self, x):
        return self.activation(x)


# ----------------------------- reference + test ------------------------------

def _ref_softmax(x, dim, log):
    x32 = x.astype(jnp.float32)
    out = jax.nn.log_softmax(x32, axis=dim) if log else jax.nn.softmax(x32, axis=dim)
    return out.astype(x.dtype)


if __name__ == "__main__":
    key = jax.random.PRNGKey(0)
    # NCHW, matching PyTorch conv-output convention
    x = jax.random.normal(key, (2, 4, 16, 16), dtype=jnp.float32)

    checks = []

    # identity (no-op)
    y = jax.block_until_ready(Activation("identity")(x))
    checks.append(jnp.allclose(y, x))

    # sigmoid
    y = jax.block_until_ready(Activation("sigmoid")(x))
    checks.append(jnp.allclose(y, jax.nn.sigmoid(x), atol=1e-6))

    # softmax2d (softmax over channel dim=1 of NCHW)
    y = jax.block_until_ready(Activation("softmax2d")(x))
    checks.append(jnp.allclose(y, _ref_softmax(x, 1, log=False), atol=1e-6))

    # softmax with explicit dim
    y = jax.block_until_ready(Activation("softmax", dim=1)(x))
    checks.append(jnp.allclose(y, _ref_softmax(x, 1, log=False), atol=1e-6))

    # softmax over the last axis (degenerate L==1 path)
    y = jax.block_until_ready(Activation("softmax", dim=-1)(x))
    checks.append(jnp.allclose(y, _ref_softmax(x, -1, log=False), atol=1e-6))

    # logsoftmax with explicit dim
    y = jax.block_until_ready(Activation("logsoftmax", dim=1)(x))
    checks.append(jnp.allclose(y, _ref_softmax(x, 1, log=True), atol=1e-5))

    # callable (factory) passthrough branch, matching PyTorch semantics
    y = jax.block_until_ready(Activation(lambda: sigmoid)(x))
    checks.append(jnp.allclose(y, jax.nn.sigmoid(x), atol=1e-6))

    assert all(bool(c) for c in checks), "mismatch vs reference"
    print("KERNEL_OK")
</pallas_src>

<mosaic_0001>
module attributes {stable_mosaic.version = 11 : i64} {
  func.func @_sigmoid_kernel(%arg0: i32, %arg1: i32, %arg2: memref<8x256xf32, #tpu.memory_space<vmem>>, %arg3: memref<8x256xf32, #tpu.memory_space<vmem>>) attributes {dimension_semantics = [#tpu.dimension_semantics<parallel>, #tpu.dimension_semantics<parallel>], iteration_bounds = array<i64: 1, 1>, scalar_prefetch = 0 : i64, scratch_operands = 0 : i64, tpu.core_type = #tpu.core_type<tc>, window_params = [{transform_indices = @transform_0, window_bounds = array<i64: 8, 256>}, {transform_indices = @transform_1, window_bounds = array<i64: 8, 256>}]} {
    %c0 = arith.constant 0 : index
    %c0_0 = arith.constant 0 : index
    %0 = vector.load %arg2[%c0, %c0_0] : memref<8x256xf32, #tpu.memory_space<vmem>>, vector<8x256xf32>
    %1 = arith.negf %0 : vector<8x256xf32>
    %2 = math.exp %1 : vector<8x256xf32>
    %cst = arith.constant 1.000000e+00 : f32
    %3 = vector.broadcast %cst : f32 to vector<8x256xf32>
    %4 = arith.addf %3, %2 : vector<8x256xf32>
    %5 = arith.divf %3, %4 : vector<8x256xf32>
    %c0_1 = arith.constant 0 : index
    %c0_2 = arith.constant 0 : index
    %6 = vector.load %arg3[%c0_1, %c0_2] : memref<8x256xf32, #tpu.memory_space<vmem>>, vector<8x256xf32>
    tpu.vector_store %arg3[%c0_1, %c0_2], %5 {strides = array<i32>} : memref<8x256xf32, #tpu.memory_space<vmem>>, vector<8x256xf32>,
    return
  }
  func.func @transform_0(%arg0: i32, %arg1: i32) -> (i32, i32) {
    %c0_i32 = arith.constant 0 : i32
    return %arg0, %arg1 : i32, i32
  }
  func.func @transform_1(%arg0: i32, %arg1: i32) -> (i32, i32) {
    %c0_i32 = arith.constant 0 : i32
    return %arg0, %arg1 : i32, i32
  }
}

</mosaic_0001>

<llo_original>
// kernel: tpu_custom_call.1
$region0: #{tpu_custom_call.1}
  #allocation0 [shape = 'u32[]', space=smem, size = 0x4, offset = 0x4, fixed_abs, tag = 'smem constant byte address 0x4 - core index']
  #allocation1 [shape = 'u32[144,128]{1,0:T(1,128)}', space=vmem, size = 0x12000, scoped, tag = 'internal scratch']
  %s0 = inlined_call_operand.hbm [shape: f32[8,256], index: 0, kind: input, shape index: {}]
  %s1 = inlined_call_operand.hbm [shape: f32[8,256], index: 1, kind: output, shape index: {}]
  %s2 = sld [smem:[#allocation0]]
  $region18: #{tpu_custom_call.1} parent=0
    _
  %s4 = ssub.s32 1, %s2
  %s5 = scalar_select 0, %s4, %s2
  $region1: #{tpu_custom_call.1} parent=0
    #allocation2 [shape = 'u8[8192]{0}', space=vmem, size = 0x2000, scoped, tag = 'input window, operand 0, single buffered']
    #allocation3 [shape = 's32[1]{0}', space=sflag, size = 0x4, scoped, tag = 'scoped memory for tpu_custom_call.1']
    #allocation4 [shape = 's32[1]{0}', space=sflag, size = 0x4, scoped, tag = 'scoped memory for tpu_custom_call.1']
    #allocation5 [shape = 'u8[8192]{0}', space=vmem, size = 0x2000, scoped, tag = 'output window, operand 0, single buffered']
    %6 = vsyncpa [#allocation3], 0
    %7 = vsyncpa [#allocation4], 0
    // Predicated region
    $region2: #{tpu_custom_call.1} parent=1 // pred_check
      _
    $region3: #{tpu_custom_call.1} parent=1 // pred_check_branch
      %9 = sbr.rel (0) target = $region5
    $region4: #{tpu_custom_call.1} parent=1 // pred_region
      %s11 = ssub.s32 256, 256
      %12 = vsyncadd [#allocation3], %s11
      %s14 = sshll.u32 [#allocation2], 4
      %s15 = int_to_ptr.vmem [resolvable:$true] %s14
      %17 = dma.hbm_to_vmem [thread:$0]  %s0, 256, %s15, [#allocation3]
    $region5: #{tpu_custom_call.1} parent=1 // pred_fallthru
      _
    // Predicated region
    $region6: #{tpu_custom_call.1} parent=1 // pred_check
      _
    $region7: #{tpu_custom_call.1} parent=1 // pred_check_branch
      %19 = sbr.rel (0) target = $region9
    $region8: #{tpu_custom_call.1} parent=1 // pred_region
      %20 = dma.done [#allocation3], 256
    $region9: #{tpu_custom_call.1} parent=1 // pred_fallthru
      _
    %v21 = vld [vmem:[#allocation2] sm:$0xff]
    %v22 = vld [vmem:[#allocation2 + $0x8] sm:$0xff]
    %v23 = vxor.u32 %v21, 2147483648
    %v24 = vxor.u32 %v22, 2147483648
    %v25 = vmul.f32 %v23, 1.442695
    %v26 = vpow.pop %v25
    %v27 = vmul.f32 %v24, 1.442695
    %v28 = vpow.pop %v27
    %v29 = vadd.f32 %v26, 1.0
    %v30 = vadd.f32 %v28, 1.0
    %v31 = vrcp.pop %v29
    %v32 = vmul.f32 1.0, %v31
    %v33 = vrcp.pop %v30
    %v34 = vmul.f32 1.0, %v33
    %35 = vst [vmem:[#allocation5] sm:$0xff] %v32
    %36 = vst [vmem:[#allocation5 + $0x8] sm:$0xff] %v34
    // Predicated region
    $region10: #{tpu_custom_call.1} parent=1 // pred_check
      _
    $region11: #{tpu_custom_call.1} parent=1 // pred_check_branch
      %38 = sbr.rel (0) target = $region13
    $region12: #{tpu_custom_call.1} parent=1 // pred_region
      %s40 = ssub.s32 256, 256
      %41 = vsyncadd [#allocation4], %s40
      %s43 = sshll.u32 [#allocation5], 4
      %s44 = int_to_ptr.vmem [resolvable:$true] %s43
      %46 = dma.vmem_to_hbm [thread:$0]  %s44, 256, %s1, [#allocation4]
    $region13: #{tpu_custom_call.1} parent=1 // pred_fallthru
      _
    // Predicated region
    $region14: #{tpu_custom_call.1} parent=1 // pred_check
      _
    $region15: #{tpu_custom_call.1} parent=1 // pred_check_branch
      %48 = sbr.rel (0) target = $region17
    $region16: #{tpu_custom_call.1} parent=1 // pred_region
      %49 = dma.done [#allocation4], 256
    $region17: #{tpu_custom_call.1} parent=1 // pred_fallthru
      _
    %50 = vsyncpa [#allocation3], 1
    %51 = vsyncpa [#allocation4], 1

</llo_original>
